<compile_context>
chip_gen: v7x
topology: tpu7x:2x2x1
jax: 0.10.0
libtpu: 0.0.40
codegen_flags: <defaults>
</compile_context>

<pallas_src>
import functools
import math

import jax
import jax.numpy as jnp
from jax import lax
from jax.experimental import pallas as pl
from jax.experimental.pallas import tpu as pltpu


_SQRT_2_OVER_PI = math.sqrt(2.0 / math.pi)


def _gelu_new(x):
    # HuggingFace NewGELUActivation (tanh approximation), computed in float32.
    return 0.5 * x * (1.0 + jnp.tanh(_SQRT_2_OVER_PI * (x + 0.044715 * x * x * x)))


def _layernorm_f32(x_f32, gamma_f32, beta_f32, eps):
    # nn.LayerNorm: mean subtraction, biased variance, weight + bias.
    mean = jnp.mean(x_f32, axis=-1, keepdims=True)
    xc = x_f32 - mean
    var = jnp.mean(xc * xc, axis=-1, keepdims=True)
    ln = xc * lax.rsqrt(var + eps)
    return ln * gamma_f32 + beta_f32


def _round_up(n, m):
    return (n + m - 1) // m * m


# --------------------------------------------------------------------------
# Kernel bodies
# --------------------------------------------------------------------------

def _ff_kernel_resident(x_ref, g_ref, b_ref, wi_ref, wo_ref, o_ref, *, eps):
    """Weights fully VMEM-resident: grid = (M_tiles,) only."""
    x = x_ref[...].astype(jnp.float32)
    ln = _layernorm_f32(x, g_ref[...].astype(jnp.float32),
                        b_ref[...].astype(jnp.float32), eps)
    # Feed the MXU at the weight dtype (bf16 weights -> bf16 LHS).
    ln = ln.astype(wi_ref.dtype)
    h = jnp.dot(ln, wi_ref[...], preferred_element_type=jnp.float32)
    h = _gelu_new(h)
    # inner dropout: identity at inference.
    ffn = jnp.dot(h.astype(wo_ref.dtype), wo_ref[...],
                  preferred_element_type=jnp.float32)
    # residual add (outer dropout also identity at inference).
    o_ref[...] = (x + ffn).astype(o_ref.dtype)


def _ff_kernel_streaming(x_ref, g_ref, b_ref, wi_ref, wo_ref, o_ref,
                         ln_ref, acc_ref, *, eps):
    """Weights streamed over the F ("arbitrary") grid axis."""
    f = pl.program_id(1)

    @pl.when(f == 0)
    def _():
        x = x_ref[...].astype(jnp.float32)
        ln = _layernorm_f32(x, g_ref[...].astype(jnp.float32),
                            b_ref[...].astype(jnp.float32), eps)
        ln_ref[...] = ln.astype(ln_ref.dtype)
        # Initialize the accumulator with the residual: the final step then
        # stores the accumulator directly (no x re-read / extra add pass).
        acc_ref[...] = x

    # wi tile: (H, tf), wo tile: (tf, H). f32 accumulation on the MXU.
    h = jnp.dot(ln_ref[...], wi_ref[...], preferred_element_type=jnp.float32)
    h = _gelu_new(h)
    acc_ref[...] += jnp.dot(h.astype(wo_ref.dtype), wo_ref[...],
                            preferred_element_type=jnp.float32)

    @pl.when(f == pl.num_programs(1) - 1)
    def _():
        o_ref[...] = acc_ref[...].astype(o_ref.dtype)


# --------------------------------------------------------------------------
# Wrapper
# --------------------------------------------------------------------------

def _vmem_capacity_bytes():
    """Per-TensorCore VMEM capacity; conservative fallback if undetectable."""
    try:
        cap = getattr(pltpu.get_tpu_info(), "vmem_capacity_bytes", None)
        if cap:
            return int(cap)
    except Exception:
        pass
    try:
        kind = jax.devices()[0].device_kind.lower()
        if ("v5" in kind) or ("v6" in kind):
            return 128 << 20
    except Exception:
        pass
    return 64 << 20  # v7x per-TC VMEM (safe lower bound)


def pix2struct_text_layer_ff(hidden_states, ln_weight, ln_bias, wi_t, wo_t,
                             *, eps=1e-6, tm=512, tf=512,
                             force_streaming=False):
    """Fused LayerNorm -> Linear(H,F) -> gelu_new -> Linear(F,H) -> residual.

    hidden_states: (B, S, H)
    ln_weight, ln_bias: (H,)
    wi_t: (H, F)  == wi.weight.T   (transpose once at load time, not per call)
    wo_t: (F, H)  == wo.weight.T
    """
    B, S, H = hidden_states.shape
    Hw, F = wi_t.shape
    assert Hw == H and wo_t.shape == (F, H)

    out_dtype = hidden_states.dtype
    w_dtype = wi_t.dtype
    x_item = jnp.dtype(out_dtype).itemsize
    w_item = jnp.dtype(w_dtype).itemsize

    M = B * S
    x2d = hidden_states.reshape(M, H)

    # sublane multiple for the row tile depends on the element width.
    sublane = {4: 8, 2: 16, 1: 32}.get(x_item, 8)

    gamma = ln_weight.reshape(1, H)
    beta = ln_bias.reshape(1, H)

    capacity = _vmem_capacity_bytes()
    usable = int(capacity * 0.80)                 # headroom for Mosaic scratch
    vmem_limit = max(32 << 20, usable)
    headroom = 2 << 20

    # Note: with f32 weights jnp.dot uses the TPU default (lowest) matmul
    # precision; expected tolerance vs an fp32 reference is ~1e-2. Pass-through
    # of bf16 weights runs at native MXU rate.

    def resident_footprint(tm_e):
        return (
            2 * H * F * w_item            # wi.T + wo.T, single-buffered (resident)
            + 2 * H * w_item              # gamma + beta (resident)
            + 4 * tm_e * H * x_item       # x / out tiles, double-buffered
            + tm_e * H * (4 + w_item)     # f32 LayerNorm + weight-dtype cast
            + tm_e * F * (4 + w_item)     # f32 gelu intermediate + cast copy
            + headroom
        )

    # ---- Path selection: VMEM-resident weights when they fit. ----
    tm_res = None
    if not force_streaming:
        for cand in (tm, 256, 128):
            tm_e = min(cand, _round_up(M, sublane))
            if resident_footprint(tm_e) <= usable:
                tm_res = tm_e
                break

    if tm_res is not None:
        # ---------------- RESIDENT path ----------------
        tm_eff = tm_res
        m_pad = _round_up(M, tm_eff)
        if m_pad != M:
            x2d = jnp.pad(x2d, ((0, m_pad - M), (0, 0)))
        grid = (m_pad // tm_eff,)

        cost = pl.CostEstimate(
            flops=4 * M * H * F + 10 * M * H,
            transcendentals=M * F,
            # weights read exactly once + x read + out write + ln params.
            bytes_accessed=2 * M * H * x_item + (2 * H * F + 2 * H) * w_item,
        )

        out2d = pl.pallas_call(
            functools.partial(_ff_kernel_resident, eps=float(eps)),
            out_shape=jax.ShapeDtypeStruct((m_pad, H), out_dtype),
            grid_spec=pltpu.PrefetchScalarGridSpec(
                num_scalar_prefetch=0,
                grid=grid,
                in_specs=[
                    pl.BlockSpec((tm_eff, H), lambda i: (i, 0)),        # x rows
                    pl.BlockSpec(memory_space=pltpu.MemorySpace.VMEM),  # gamma
                    pl.BlockSpec(memory_space=pltpu.MemorySpace.VMEM),  # beta
                    pl.BlockSpec(memory_space=pltpu.MemorySpace.VMEM),  # wi.T
                    pl.BlockSpec(memory_space=pltpu.MemorySpace.VMEM),  # wo.T
                ],
                out_specs=pl.BlockSpec((tm_eff, H), lambda i: (i, 0)),
            ),
            compiler_params=pltpu.CompilerParams(
                dimension_semantics=("parallel",),
                vmem_limit_bytes=vmem_limit,
            ),
            cost_estimate=cost,
        )(x2d, gamma, beta, wi_t, wo_t)

    else:
        # ---------------- STREAMING fallback ----------------
        def streaming_footprint(tm_e, tf_e):
            return (
                4 * tm_e * H * x_item            # x / out tiles, double-buffered
                + 4 * H * tf_e * w_item          # wi + wo tiles, double-buffered
                + 4 * H * w_item                 # gamma / beta
                + tm_e * H * (4 + w_item)        # acc + ln scratch
                + tm_e * tf_e * (4 + w_item)     # gelu intermediate + cast
                + headroom
            )

        tm_req = min(tm, _round_up(M, sublane))
        tf_req = F if F <= tf else tf
        tm_eff, tf_eff = tm_req, tf_req
        found = False
        for tm_c in (tm_req, 256, 128):
            tm_c = min(tm_c, tm_req)
            for tf_c in (tf_req, 256, 128):
                tf_c = min(tf_c, tf_req)
                if streaming_footprint(tm_c, tf_c) <= usable:
                    tm_eff, tf_eff = tm_c, tf_c
                    found = True
                    break
            if found:
                break

        m_pad = _round_up(M, tm_eff)
        f_pad = _round_up(F, tf_eff)
        if m_pad != M:
            x2d = jnp.pad(x2d, ((0, m_pad - M), (0, 0)))
        wi_s, wo_s = wi_t, wo_t
        if f_pad != F:
            # Zero-padded d_ff columns (wi) / rows (wo) contribute exactly zero.
            wi_s = jnp.pad(wi_t, ((0, 0), (0, f_pad - F)))
            wo_s = jnp.pad(wo_t, ((0, f_pad - F), (0, 0)))

        grid = (m_pad // tm_eff, f_pad // tf_eff)
        m_tiles = grid[0]

        cost = pl.CostEstimate(
            flops=4 * M * H * F + 10 * M * H,
            transcendentals=M * F,
            # weights are re-streamed once per row tile in this layout.
            bytes_accessed=(2 * M * H * x_item
                            + (m_tiles * 2 * H * F + 2 * H) * w_item),
        )

        out2d = pl.pallas_call(
            functools.partial(_ff_kernel_streaming, eps=float(eps)),
            out_shape=jax.ShapeDtypeStruct((m_pad, H), out_dtype),
            grid_spec=pltpu.PrefetchScalarGridSpec(
                num_scalar_prefetch=0,
                grid=grid,
                in_specs=[
                    pl.BlockSpec((tm_eff, H), lambda i, f: (i, 0)),   # x rows
                    pl.BlockSpec((1, H), lambda i, f: (0, 0)),        # gamma
                    pl.BlockSpec((1, H), lambda i, f: (0, 0)),        # beta
                    pl.BlockSpec((H, tf_eff), lambda i, f: (0, f)),   # wi.T tile
                    pl.BlockSpec((tf_eff, H), lambda i, f: (f, 0)),   # wo.T tile
                ],
                out_specs=pl.BlockSpec((tm_eff, H), lambda i, f: (i, 0)),
                scratch_shapes=[
                    pltpu.VMEM((tm_eff, H), w_dtype),     # LayerNorm output
                    pltpu.VMEM((tm_eff, H), jnp.float32), # residual-init acc
                ],
            ),
            compiler_params=pltpu.CompilerParams(
                dimension_semantics=("parallel", "arbitrary"),
                vmem_limit_bytes=vmem_limit,
            ),
            cost_estimate=cost,
        )(x2d, gamma, beta, wi_s, wo_s)

    if m_pad != M:
        out2d = out2d[:M]
    return out2d.reshape(B, S, H)


# --------------------------------------------------------------------------
# Reference + test
# --------------------------------------------------------------------------

def _reference(hidden_states, ln_w, ln_b, wi_weight, wo_weight, eps=1e-6):
    x = hidden_states.astype(jnp.float32)
    mean = jnp.mean(x, axis=-1, keepdims=True)
    var = jnp.mean((x - mean) ** 2, axis=-1, keepdims=True)
    ln = (x - mean) / jnp.sqrt(var + eps)
    ln = ln * ln_w.astype(jnp.float32) + ln_b.astype(jnp.float32)
    h = ln @ wi_weight.T.astype(jnp.float32)
    h = _gelu_new(h)
    ffn = h @ wo_weight.T.astype(jnp.float32)
    return (x + ffn).astype(hidden_states.dtype)


if __name__ == "__main__":
    # Small config: hidden_size=32, d_ff=64, batch=2, seq=8.
    B, S, H, F = 2, 8, 32, 64
    key = jax.random.PRNGKey(0)
    k_x, k_wi, k_wo, k_g, k_b = jax.random.split(key, 5)

    hidden_states = jax.random.normal(k_x, (B, S, H), dtype=jnp.float32)
    # nn.Linear stores weight as (out_features, in_features).
    wi_weight = jax.random.normal(k_wi, (F, H), dtype=jnp.float32) * 0.05
    wo_weight = jax.random.normal(k_wo, (H, F), dtype=jnp.float32) * 0.05
    ln_weight = 1.0 + 0.1 * jax.random.normal(k_g, (H,), dtype=jnp.float32)
    ln_bias = 0.05 * jax.random.normal(k_b, (H,), dtype=jnp.float32)

    # Pre-transpose the Linear weights once (load-time cost, not per call).
    wi_t = jnp.asarray(wi_weight.T)   # (H, F)
    wo_t = jnp.asarray(wo_weight.T)   # (F, H)

    ref = _reference(hidden_states, ln_weight, ln_bias, wi_weight, wo_weight)

    # Resident-weight path (the default for Pix2Struct-sized weights).
    out_res = pix2struct_text_layer_ff(hidden_states, ln_weight, ln_bias,
                                       wi_t, wo_t, eps=1e-6)
    out_res = jax.block_until_ready(out_res)
    assert out_res.shape == (B, S, H)
    # Tolerance covers MXU default matmul precision differences vs XLA ref.
    assert jnp.allclose(out_res, ref, atol=2e-2, rtol=2e-2), \
        "resident path mismatch vs reference"

    # Streaming fallback path (exercised explicitly for coverage).
    out_str = pix2struct_text_layer_ff(hidden_states, ln_weight, ln_bias,
                                       wi_t, wo_t, eps=1e-6,
                                       force_streaming=True)
    out_str = jax.block_until_ready(out_str)
    assert out_str.shape == (B, S, H)
    assert jnp.allclose(out_str, ref, atol=2e-2, rtol=2e-2), \
        "streaming path mismatch vs reference"

    print("KERNEL_OK")
</pallas_src>

<mosaic_0001>
module attributes {stable_mosaic.version = 11 : i64} {
  func.func @_ff_kernel_resident(%arg0: i32, %arg1: memref<16x32xf32, #tpu.memory_space<vmem>>, %arg2: memref<1x32xf32, #tpu.memory_space<vmem>>, %arg3: memref<1x32xf32, #tpu.memory_space<vmem>>, %arg4: memref<32x64xf32, #tpu.memory_space<vmem>>, %arg5: memref<64x32xf32, #tpu.memory_space<vmem>>, %arg6: memref<16x32xf32, #tpu.memory_space<vmem>>) attributes {dimension_semantics = [#tpu.dimension_semantics<parallel>], iteration_bounds = array<i64: 1>, scalar_prefetch = 0 : i64, scratch_operands = 0 : i64, tpu.core_type = #tpu.core_type<tc>, window_params = [{transform_indices = @transform_0, window_bounds = array<i64: 16, 32>}, {pipeline_mode = #tpu.pipeline_mode<synchronous>, transform_indices = @transform_1, window_bounds = array<i64: 1, 32>}, {pipeline_mode = #tpu.pipeline_mode<synchronous>, transform_indices = @transform_2, window_bounds = array<i64: 1, 32>}, {pipeline_mode = #tpu.pipeline_mode<synchronous>, transform_indices = @transform_3, window_bounds = array<i64: 32, 64>}, {pipeline_mode = #tpu.pipeline_mode<synchronous>, transform_indices = @transform_4, window_bounds = array<i64: 64, 32>}, {transform_indices = @transform_5, window_bounds = array<i64: 16, 32>}]} {
    %c0 = arith.constant 0 : index
    %c0_0 = arith.constant 0 : index
    %0 = vector.load %arg1[%c0, %c0_0] : memref<16x32xf32, #tpu.memory_space<vmem>>, vector<16x32xf32>
    %c0_1 = arith.constant 0 : index
    %c0_2 = arith.constant 0 : index
    %1 = vector.load %arg2[%c0_1, %c0_2] : memref<1x32xf32, #tpu.memory_space<vmem>>, vector<1x32xf32>
    %c0_3 = arith.constant 0 : index
    %c0_4 = arith.constant 0 : index
    %2 = vector.load %arg3[%c0_3, %c0_4] : memref<1x32xf32, #tpu.memory_space<vmem>>, vector<1x32xf32>
    %cst = arith.constant dense<0.000000e+00> : vector<16xf32>
    %3 = vector.multi_reduction <add>, %0, %cst [1] : vector<16x32xf32> to vector<16xf32>
    %4 = vector.shape_cast %3 : vector<16xf32> to vector<16x1xf32>
    %cst_5 = arith.constant 3.200000e+01 : f32
    %5 = vector.broadcast %cst_5 : f32 to vector<16x1xf32>
    %6 = arith.divf %4, %5 : vector<16x1xf32>
    %7 = vector.broadcast %6 : vector<16x1xf32> to vector<16x32xf32>
    %8 = arith.subf %0, %7 : vector<16x32xf32>
    %9 = arith.mulf %8, %8 : vector<16x32xf32>
    %cst_6 = arith.constant dense<0.000000e+00> : vector<16xf32>
    %10 = vector.multi_reduction <add>, %9, %cst_6 [1] : vector<16x32xf32> to vector<16xf32>
    %11 = vector.shape_cast %10 : vector<16xf32> to vector<16x1xf32>
    %cst_7 = arith.constant 3.200000e+01 : f32
    %12 = vector.broadcast %cst_7 : f32 to vector<16x1xf32>
    %13 = arith.divf %11, %12 : vector<16x1xf32>
    %cst_8 = arith.constant 9.99999997E-7 : f32
    %14 = vector.broadcast %cst_8 : f32 to vector<16x1xf32>
    %15 = arith.addf %13, %14 : vector<16x1xf32>
    %16 = math.rsqrt %15 : vector<16x1xf32>
    %17 = vector.broadcast %16 : vector<16x1xf32> to vector<16x32xf32>
    %18 = arith.mulf %8, %17 : vector<16x32xf32>
    %19 = vector.broadcast %1 : vector<1x32xf32> to vector<16x32xf32>
    %20 = arith.mulf %18, %19 : vector<16x32xf32>
    %21 = vector.broadcast %2 : vector<1x32xf32> to vector<16x32xf32>
    %22 = arith.addf %20, %21 : vector<16x32xf32>
    %c0_9 = arith.constant 0 : index
    %c0_10 = arith.constant 0 : index
    %23 = vector.load %arg4[%c0_9, %c0_10] : memref<32x64xf32, #tpu.memory_space<vmem>>, vector<32x64xf32>
    %cst_11 = arith.constant dense<0.000000e+00> : vector<16x64xf32>
    %24 = tpu.matmul %22, %23, %cst_11 {dimension_numbers = #tpu.dot_dimension_numbers<[1], [0], [0], [1], [0, 0, 1, 1], [], []>} : vector<16x32xf32>, vector<32x64xf32>, vector<16x64xf32> -> vector<16x64xf32>
    %cst_12 = arith.constant 5.000000e-01 : f32
    %25 = vector.broadcast %cst_12 : f32 to vector<16x64xf32>
    %26 = arith.mulf %25, %24 : vector<16x64xf32>
    %cst_13 = arith.constant 4.471500e-02 : f32
    %27 = vector.broadcast %cst_13 : f32 to vector<16x64xf32>
    %28 = arith.mulf %27, %24 : vector<16x64xf32>
    %29 = arith.mulf %28, %24 : vector<16x64xf32>
    %30 = arith.mulf %29, %24 : vector<16x64xf32>
    %31 = arith.addf %24, %30 : vector<16x64xf32>
    %cst_14 = arith.constant 0.797884583 : f32
    %32 = vector.broadcast %cst_14 : f32 to vector<16x64xf32>
    %33 = arith.mulf %32, %31 : vector<16x64xf32>
    %34 = math.tanh %33 : vector<16x64xf32>
    %cst_15 = arith.constant 1.000000e+00 : f32
    %35 = vector.broadcast %cst_15 : f32 to vector<16x64xf32>
    %36 = arith.addf %35, %34 : vector<16x64xf32>
    %37 = arith.mulf %26, %36 : vector<16x64xf32>
    %c0_16 = arith.constant 0 : index
    %c0_17 = arith.constant 0 : index
    %38 = vector.load %arg5[%c0_16, %c0_17] : memref<64x32xf32, #tpu.memory_space<vmem>>, vector<64x32xf32>
    %cst_18 = arith.constant dense<0.000000e+00> : vector<16x32xf32>
    %39 = tpu.matmul %37, %38, %cst_18 {dimension_numbers = #tpu.dot_dimension_numbers<[1], [0], [0], [1], [0, 0, 1, 1], [], []>} : vector<16x64xf32>, vector<64x32xf32>, vector<16x32xf32> -> vector<16x32xf32>
    %40 = arith.addf %0, %39 : vector<16x32xf32>
    %c0_19 = arith.constant 0 : index
    %c0_20 = arith.constant 0 : index
    %41 = vector.load %arg6[%c0_19, %c0_20] : memref<16x32xf32, #tpu.memory_space<vmem>>, vector<16x32xf32>
    tpu.vector_store %arg6[%c0_19, %c0_20], %40 {strides = array<i32>} : memref<16x32xf32, #tpu.memory_space<vmem>>, vector<16x32xf32>,
    return
  }
  func.func @transform_0(%arg0: i32) -> (i32, i32) {
    %c0_i32 = arith.constant 0 : i32
    %c0_i32_0 = arith.constant 0 : i32
    return %arg0, %c0_i32 : i32, i32
  }
  func.func @transform_1(%arg0: i32) -> (i32, i32) {
    %c0_i32 = arith.constant 0 : i32
    %c0_i32_0 = arith.constant 0 : i32
    %c0_i32_1 = arith.constant 0 : i32
    return %c0_i32, %c0_i32_0 : i32, i32
  }
  func.func @transform_2(%arg0: i32) -> (i32, i32) {
    %c0_i32 = arith.constant 0 : i32
    %c0_i32_0 = arith.constant 0 : i32
    %c0_i32_1 = arith.constant 0 : i32
    return %c0_i32, %c0_i32_0 : i32, i32
  }
  func.func @transform_3(%arg0: i32) -> (i32, i32) {
    %c0_i32 = arith.constant 0 : i32
    %c0_i32_0 = arith.constant 0 : i32
    %c0_i32_1 = arith.constant 0 : i32
    return %c0_i32, %c0_i32_0 : i32, i32
  }
  func.func @transform_4(%arg0: i32) -> (i32, i32) {
    %c0_i32 = arith.constant 0 : i32
    %c0_i32_0 = arith.constant 0 : i32
    %c0_i32_1 = arith.constant 0 : i32
    return %c0_i32, %c0_i32_0 : i32, i32
  }
  func.func @transform_5(%arg0: i32) -> (i32, i32) {
    %c0_i32 = arith.constant 0 : i32
    %c0_i32_0 = arith.constant 0 : i32
    return %arg0, %c0_i32 : i32, i32
  }
}

</mosaic_0001>

<llo_original>
// kernel: tpu_custom_call.1
$region0: #{tpu_custom_call.1}
  #allocation0 [shape = 'u32[]', space=smem, size = 0x4, offset = 0x4, fixed_abs, tag = 'smem constant byte address 0x4 - core index']
  #allocation1 [shape = 'u32[144,128]{1,0:T(1,128)}', space=vmem, size = 0x12000, scoped, tag = 'internal scratch']
  %s0 = inlined_call_operand.vmem [shape: f32[16,32], index: 0, kind: input, shape index: {}]
  %s1 = inlined_call_operand.vmem [shape: f32[1,32], index: 1, kind: input, shape index: {}]
  %s2 = inlined_call_operand.vmem [shape: f32[1,32], index: 2, kind: input, shape index: {}]
  %s3 = inlined_call_operand.vmem [shape: f32[32,64], index: 3, kind: input, shape index: {}]
  %s4 = inlined_call_operand.vmem [shape: f32[64,32], index: 4, kind: input, shape index: {}]
  %s5 = inlined_call_operand.hbm [shape: f32[16,32], index: 5, kind: output, shape index: {}]
  %s6 = sld [smem:[#allocation0]]
  $region30: #{tpu_custom_call.1} parent=0
    _
  %s8 = ssub.s32 1, %s6
  %s9 = scalar_select 0, %s8, %s6
  $region1: #{tpu_custom_call.1} parent=0
    #allocation2 [shape = 'u8[8192]{0}', space=vmem, size = 0x2000, scoped, tag = 'output window, operand 0, single buffered']
    #allocation3 [shape = 's32[1]{0}', space=sflag, size = 0x4, scoped, tag = 'scoped memory for tpu_custom_call.1']
    %10 = vsyncpa [#allocation3], 0
    // Predicated region
    $region2: #{tpu_custom_call.1} parent=1 // pred_check
      _
    $region3: #{tpu_custom_call.1} parent=1 // pred_check_branch
      %12 = sbr.rel (0) target = $region5
    $region4: #{tpu_custom_call.1} parent=1 // pred_region
      _
    $region5: #{tpu_custom_call.1} parent=1 // pred_fallthru
      _
    // Predicated region
    $region6: #{tpu_custom_call.1} parent=1 // pred_check
      _
    $region7: #{tpu_custom_call.1} parent=1 // pred_check_branch
      %14 = sbr.rel (0) target = $region9
    $region8: #{tpu_custom_call.1} parent=1 // pred_region
      _
    $region9: #{tpu_custom_call.1} parent=1 // pred_fallthru
      _
    // Predicated region
    $region10: #{tpu_custom_call.1} parent=1 // pred_check
      _
    $region11: #{tpu_custom_call.1} parent=1 // pred_check_branch
      %16 = sbr.rel (0) target = $region13
    $region12: #{tpu_custom_call.1} parent=1 // pred_region
      _
    $region13: #{tpu_custom_call.1} parent=1 // pred_fallthru
      _
    // Predicated region
    $region14: #{tpu_custom_call.1} parent=1 // pred_check
      _
    $region15: #{tpu_custom_call.1} parent=1 // pred_check_branch
      %18 = sbr.rel (0) target = $region17
    $region16: #{tpu_custom_call.1} parent=1 // pred_region
      _
    $region17: #{tpu_custom_call.1} parent=1 // pred_fallthru
      _
    // Predicated region
    $region18: #{tpu_custom_call.1} parent=1 // pred_check
      _
    $region19: #{tpu_custom_call.1} parent=1 // pred_check_branch
      %20 = sbr.rel (0) target = $region21
    $region20: #{tpu_custom_call.1} parent=1 // pred_region
      _
    $region21: #{tpu_custom_call.1} parent=1 // pred_fallthru
      _
    %v21 = vld [vmem:[%s0] sm:$0xff]
    %v22 = vld [vmem:[%s0 + $0x8] sm:$0xff]
    %v23 = vld [vmem:[%s1] sm:$0x1]
    %v24 = vld [vmem:[%s2] sm:$0x1]
    %vm25 = vcmask 261120
    %v26 = vsel %vm25, %v21, 0.0
    %27 = vadd.xlane.f32.xlu0 %v26
    %v28 = vpop.xlane.xlu0 %27
    %v29 = vsel %vm25, %v22, 0.0
    %30 = vadd.xlane.f32.xlu0 %v29
    %v31 = vpop.xlane.xlu0 %30
    %v32 = vrcp.pop 32.0
    %v33 = vmul.f32 %v28, %v32
    %v34 = vmul.f32 %v31, %v32
    %v35 = vsub.f32 %v21, %v33
    %v36 = vsub.f32 %v22, %v34
    %v37 = vmul.f32 %v35, %v35
    %v38 = vmul.f32 %v36, %v36
    %v39 = vsel %vm25, %v37, 0.0
    %40 = vadd.xlane.f32.xlu0 %v39
    %v41 = vpop.xlane.xlu0 %40
    %v42 = vsel %vm25, %v38, 0.0
    %43 = vadd.xlane.f32.xlu0 %v42
    %v44 = vpop.xlane.xlu0 %43
    %v45 = vmul.f32 %v41, %v32
    %v46 = vmul.f32 %v44, %v32
    %v47 = vadd.f32 %v45, 1e-06
    %v48 = vadd.f32 %v46, 1e-06
    %v49 = vrsqrt.pop %v47
    %v50 = vrsqrt.pop %v48
    %v51 = vmul.f32 %v35, %v49
    %v52 = vmul.f32 %v36, %v50
    %v54 = vlaneseq
    %v55 = vshrl.u32 %v54, 7
    %v56 = vsub.s32 0, %v55
    %v57 = vrot.slane %v23, %v56
    %v59 = vmul.f32 %v51, %v57
    %v60 = vmul.f32 %v52, %v57
    %v62 = vlaneseq
    %v63 = vshrl.u32 %v62, 7
    %v64 = vsub.s32 0, %v63
    %v65 = vrot.slane %v24, %v64
    %v67 = vadd.f32 %v59, %v65
    %v68 = vadd.f32 %v60, %v65
    %v69 = vld [vmem:[%s3] sm:$0xff]
    %v70 = vld [vmem:[%s3 + $0x8] sm:$0xff]
    %v71 = vld [vmem:[%s3 + $0x10] sm:$0xff]
    %v72 = vld [vmem:[%s3 + $0x18] sm:$0xff]
    %v74 = vsel %vm25, %v67, 0
    %v77 = vsel %vm25, %v68, 0
    %79 = vmatprep.subr.mxu0 0.0
    %80 = vmatpush1.msra.mxu0 %v69
    %81 = vmatprep.subr.mxu0 0.0
    %82 = vmatpush1.msra.mxu0 %v70
    %83 = vmatprep.subr.mxu0 0.0
    %84 = vmatpush1.msra.mxu0 %v71
    %85 = vmatprep.subr.mxu0 0.0
    %86 = vmatpush1.msra.mxu0 %v72
    %87 = vmatprep.subr.mxu0 0.0
    %88 = vmatpush1.msra.mxu0 0.0
    %89 = vmatprep.subr.mxu0 0.0
    %90 = vmatpush1.msra.mxu0 0.0
    %91 = vmatprep.subr.mxu0 0.0
    %92 = vmatpush1.msra.mxu0 0.0
    %93 = vmatprep.subr.mxu0 0.0
    %94 = vmatpush1.msra.mxu0 0.0
    %95 = vmatprep.subr.mxu0 0.0
    %96 = vmatpush1.msra.mxu0 0.0
    %97 = vmatprep.subr.mxu0 0.0
    %98 = vmatpush1.msra.mxu0 0.0
    %99 = vmatprep.subr.mxu0 0.0
    %100 = vmatpush1.msra.mxu0 0.0
    %101 = vmatprep.subr.mxu0 0.0
    %102 = vmatpush1.msra.mxu0 0.0
    %103 = vmatprep.subr.mxu0 0.0
    %104 = vmatpush1.msra.mxu0 0.0
    %105 = vmatprep.subr.mxu0 0.0
    %106 = vmatpush1.msra.mxu0 0.0
    %107 = vmatprep.subr.mxu0 0.0
    %108 = vmatpush1.msra.mxu0 0.0
    %109 = vmatprep.subr.mxu0 0.0
    %110 = vmatpush1.msra.mxu0 0.0
    %111 = vmatprep.subr.mxu0 0.0
    %112 = vmatpush1.msra.mxu0 0.0
    %113 = vmatprep.subr.mxu0 0.0
    %114 = vmatpush1.msra.mxu0 0.0
    %115 = vmatprep.subr.mxu0 0.0
    %116 = vmatpush1.msra.mxu0 0.0
    %117 = vmatprep.subr.mxu0 0.0
    %118 = vmatpush1.msra.mxu0 0.0
    %119 = vmatprep.subr.mxu0 0.0
    %120 = vmatpush1.msra.mxu0 0.0
    %121 = vmatprep.subr.mxu0 0.0
    %122 = vmatpush1.msra.mxu0 0.0
    %123 = vmatprep.subr.mxu0 0.0
    %124 = vmatpush1.msra.mxu0 0.0
    %125 = vmatprep.subr.mxu0 0.0
    %126 = vmatpush1.msra.mxu0 0.0
    %127 = vmatprep.subr.mxu0 0.0
    %128 = vmatpush1.msra.mxu0 0.0
    %129 = vmatprep.subr.mxu0 0.0
    %130 = vmatpush1.msra.mxu0 0.0
    %131 = vmatprep.subr.mxu0 0.0
    %132 = vmatpush1.msra.mxu0 0.0
    %133 = vmatprep.subr.mxu0 0.0
    %134 = vmatpush1.msra.mxu0 0.0
    %135 = vmatprep.subr.mxu0 0.0
    %136 = vmatpush1.msra.mxu0 0.0
    %137 = vmatprep.subr.mxu0 0.0
    %138 = vmatpush1.msra.mxu0 0.0
    %139 = vmatprep.subr.mxu0 0.0
    %140 = vmatpush1.msra.mxu0 0.0
    %141 = vmatprep.subr.mxu0 0.0
    %142 = vmatpush1.msra.mxu0 0.0
    %143 = vmatprep.mubr.f32.mxu0 0.0
    %144 = vmatmul.mubr.f32.gmra.mrb[0].mxu0 %v74
    %v145 = vpop.f32.mrb[0].mxu0
    %v146 = vadd.f32 0.0, %v145
    %v147 = vpop.f32.mrb[0].mxu0
    %148 = vmatprep.mubr.f32.mxu0 0.0
    %149 = vmatmul.mubr.f32.gmra.mrb[0].mxu0 %v77
    %v150 = vpop.f32.mrb[0].mxu0
    %v151 = vadd.f32 0.0, %v150
    %v152 = vpop.f32.mrb[0].mxu0
    %153 = vdwg.mxu0
    %v154 = vmul.f32 %v146, 0.5
    %v155 = vmul.f32 %v151, 0.5
    %v156 = vmul.f32 %v146, 0.044715
    %v157 = vmul.f32 %v151, 0.044715
    %v158 = vmul.f32 %v156, %v146
    %v159 = vmul.f32 %v157, %v151
    %v160 = vmul.f32 %v158, %v146
    %v161 = vmul.f32 %v159, %v151
    %v162 = vadd.f32 %v146, %v160
    %v163 = vadd.f32 %v151, %v161
    %v164 = vmul.f32 %v162, 0.7978846
    %v165 = vmul.f32 %v163, 0.7978846
    %v166 = vtanh.pop %v164
    %v167 = vtanh.pop %v165
    %v168 = vadd.f32 %v166, 1.0
    %v169 = vadd.f32 %v167, 1.0
    %v170 = vmul.f32 %v154, %v168
    %v171 = vmul.f32 %v155, %v169
    %v172 = vld [vmem:[%s4] sm:$0xff]
    %v173 = vld [vmem:[%s4 + $0x8] sm:$0xff]
    %v174 = vld [vmem:[%s4 + $0x10] sm:$0xff]
    %v175 = vld [vmem:[%s4 + $0x18] sm:$0xff]
    %v176 = vld [vmem:[%s4 + $0x20] sm:$0xff]
    %v177 = vld [vmem:[%s4 + $0x28] sm:$0xff]
    %v178 = vld [vmem:[%s4 + $0x30] sm:$0xff]
    %v179 = vld [vmem:[%s4 + $0x38] sm:$0xff]
    %vm180 = vcmask 523264
    %v182 = vsel %vm180, %v170, 0
    %v185 = vsel %vm180, %v171, 0
    %187 = vmatprep.subr.mxu0 0.0
    %188 = vmatpush1.msra.mxu0 %v172
    %189 = vmatprep.subr.mxu0 0.0
    %190 = vmatpush1.msra.mxu0 %v173
    %191 = vmatprep.subr.mxu0 0.0
    %192 = vmatpush1.msra.mxu0 %v174
    %193 = vmatprep.subr.mxu0 0.0
    %194 = vmatpush1.msra.mxu0 %v175
    %195 = vmatprep.subr.mxu0 0.0
    %196 = vmatpush1.msra.mxu0 %v176
    %197 = vmatprep.subr.mxu0 0.0
    %198 = vmatpush1.msra.mxu0 %v177
    %199 = vmatprep.subr.mxu0 0.0
    %200 = vmatpush1.msra.mxu0 %v178
    %201 = vmatprep.subr.mxu0 0.0
    %202 = vmatpush1.msra.mxu0 %v179
    %203 = vmatprep.subr.mxu0 0.0
    %204 = vmatpush1.msra.mxu0 0.0
    %205 = vmatprep.subr.mxu0 0.0
    %206 = vmatpush1.msra.mxu0 0.0
    %207 = vmatprep.subr.mxu0 0.0
    %208 = vmatpush1.msra.mxu0 0.0
    %209 = vmatprep.subr.mxu0 0.0
    %210 = vmatpush1.msra.mxu0 0.0
    %211 = vmatprep.subr.mxu0 0.0
    %212 = vmatpush1.msra.mxu0 0.0
    %213 = vmatprep.subr.mxu0 0.0
    %214 = vmatpush1.msra.mxu0 0.0
    %215 = vmatprep.subr.mxu0 0.0
    %216 = vmatpush1.msra.mxu0 0.0
    %217 = vmatprep.subr.mxu0 0.0
    %218 = vmatpush1.msra.mxu0 0.0
    %219 = vmatprep.subr.mxu0 0.0
    %220 = vmatpush1.msra.mxu0 0.0
    %221 = vmatprep.subr.mxu0 0.0
    %222 = vmatpush1.msra.mxu0 0.0
    %223 = vmatprep.subr.mxu0 0.0
    %224 = vmatpush1.msra.mxu0 0.0
    %225 = vmatprep.subr.mxu0 0.0
    %226 = vmatpush1.msra.mxu0 0.0
    %227 = vmatprep.subr.mxu0 0.0
    %228 = vmatpush1.msra.mxu0 0.0
    %229 = vmatprep.subr.mxu0 0.0
    %230 = vmatpush1.msra.mxu0 0.0
    %231 = vmatprep.subr.mxu0 0.0
    %232 = vmatpush1.msra.mxu0 0.0
    %233 = vmatprep.subr.mxu0 0.0
    %234 = vmatpush1.msra.mxu0 0.0
    %235 = vmatprep.subr.mxu0 0.0
    %236 = vmatpush1.msra.mxu0 0.0
    %237 = vmatprep.subr.mxu0 0.0
    %238 = vmatpush1.msra.mxu0 0.0
    %239 = vmatprep.subr.mxu0 0.0
    %240 = vmatpush1.msra.mxu0 0.0
    %241 = vmatprep.subr.mxu0 0.0
    %242 = vmatpush1.msra.mxu0 0.0
    %243 = vmatprep.subr.mxu0 0.0
    %244 = vmatpush1.msra.mxu0 0.0
    %245 = vmatprep.subr.mxu0 0.0
    %246 = vmatpush1.msra.mxu0 0.0
    %247 = vmatprep.subr.mxu0 0.0
    %248 = vmatpush1.msra.mxu0 0.0
    %249 = vmatprep.subr.mxu0 0.0
    %250 = vmatpush1.msra.mxu0 0.0
    %251 = vmatprep.mubr.f32.mxu0 0.0
    %252 = vmatmul.mubr.f32.gmra.mrb[0].mxu0 %v182
    %v253 = vpop.f32.mrb[0].mxu0
    %v254 = vadd.f32 0.0, %v253
    %v255 = vpop.f32.mrb[0].mxu0
    %256 = vmatprep.mubr.f32.mxu0 0.0
    %257 = vmatmul.mubr.f32.gmra.mrb[0].mxu0 %v185
    %v258 = vpop.f32.mrb[0].mxu0
    %v259 = vadd.f32 0.0, %v258
    %v260 = vpop.f32.mrb[0].mxu0
    %261 = vdwg.mxu0
    %v262 = vadd.f32 %v21, %v254
    %v263 = vadd.f32 %v22, %v259
    %264 = vst.msk [vmem:[#allocation2] sm:$0xff] %vm25, %v262
    %265 = vst.msk [vmem:[#allocation2 + $0x8] sm:$0xff] %vm25, %v263
    // Predicated region
    $region22: #{tpu_custom_call.1} parent=1 // pred_check
      _
    $region23: #{tpu_custom_call.1} parent=1 // pred_check_branch
      %267 = sbr.rel (0) target = $region25
    $region24: #{tpu_custom_call.1} parent=1 // pred_region
      %s269 = ssub.s32 256, 256
      %270 = vsyncadd [#allocation3], %s269
      %s271 = sshll.u32 [#allocation2], 4
      %s272 = int_to_ptr.vmem [resolvable:$true] %s271
      %277 = dma.vmem_to_hbm [thread:$0]  %s272, 256, %s5, [#allocation3], 128, 128, 8
    $region25: #{tpu_custom_call.1} parent=1 // pred_fallthru
      _
    // Predicated region
    $region26: #{tpu_custom_call.1} parent=1 // pred_check
      _
    $region27: #{tpu_custom_call.1} parent=1 // pred_check_branch
      %279 = sbr.rel (0) target = $region29
    $region28: #{tpu_custom_call.1} parent=1 // pred_region
      %280 = dma.done [#allocation3], 256
    $region29: #{tpu_custom_call.1} parent=1 // pred_fallthru
      _
    %281 = vsyncpa [#allocation3], 1

</llo_original>
